<compile_context>
chip_gen: v7x
topology: tpu7x:2x2x1
jax: 0.10.0
libtpu: 0.0.40
codegen_flags: <defaults>
</compile_context>

<pallas_src>
import functools

import jax
import jax.numpy as jnp
from jax import lax
from jax.experimental import pallas as pl
from jax.experimental.pallas import tpu as pltpu

_R_TILE_MAX = 4096  # rows of 128 lanes per block (f32: 2 MiB/buffer)


def _ibce_lane_kernel(x_ref, out_ref, acc_exp, acc_neg, acc_ngp, *,
                      n, dilation, stride, n_total, r_tile, needs_mask, inv_p):
    pid = pl.program_id(0)

    @pl.when(pid == 0)
    def _init():
        acc_exp[...] = jnp.zeros_like(acc_exp)
        acc_neg[...] = jnp.zeros_like(acc_neg)
        acc_ngp[...] = jnp.zeros_like(acc_ngp)

    # Load tile, cast to f32 (keeps HBM traffic at the input dtype's width).
    s = jax.nn.sigmoid(x_ref[...].astype(jnp.float32))        # (r_tile, 128)
    # Partner value: lane l pairs with lane l + dilation (same group slot).
    neg = jnp.roll(s, -dilation, axis=-1)

    lane = lax.broadcasted_iota(jnp.int32, s.shape, 1)
    pos_in_grp = lane % n
    sel = pos_in_grp < (n - dilation)                          # positive columns
    if stride > 1:
        sel = jnp.logical_and(sel, (pos_in_grp % stride) == 0)
    if needs_mask:                                             # padded tail rows
        row = lax.broadcasted_iota(jnp.int32, s.shape, 0)
        flat = (pid * r_tile + row) * 128 + lane
        sel = jnp.logical_and(sel, flat < n_total)

    zero = jnp.float32(0.0)
    e = jnp.where(sel, jnp.exp(s), zero)
    ng = jnp.where(sel, neg, zero)
    ngp = jnp.where(sel, neg * s, zero)

    # Per-lane running sums over all groups seen so far (sublanes + grid axis).
    acc_exp[...] += jnp.sum(e, axis=0, keepdims=True)
    acc_neg[...] += jnp.sum(ng, axis=0, keepdims=True)
    acc_ngp[...] += jnp.sum(ngp, axis=0, keepdims=True)

    @pl.when(pid == pl.num_programs(0) - 1)
    def _finalize():
        # Sum the 128//n group slots within the lane dimension so that lane p
        # (p < n) holds the total over ALL groups for pair position p.
        re = acc_exp[...]                                       # (1, 128)
        rn = acc_neg[...]
        sh = 64
        while sh >= n:
            re = re + jnp.roll(re, -sh, axis=-1)
            rn = rn + jnp.roll(rn, -sh, axis=-1)
            sh //= 2
        lane1 = lax.broadcasted_iota(jnp.int32, (1, 128), 1)
        sel1 = lane1 < (n - dilation)
        if stride > 1:
            sel1 = jnp.logical_and(sel1, (lane1 % stride) == 0)
        lse = jnp.log(jnp.where(sel1, re, jnp.float32(1.0)))
        first = jnp.sum(jnp.where(sel1, lse * rn, zero))        # sum_p lse_p*sum_g(neg)
        second = jnp.sum(acc_ngp[...])                          # sum_p sum_g(neg*pos)
        out_ref[0, 0] = (first - second) * jnp.float32(inv_p)


def localized_ibce_loss(logits, labels=None, *, examples_per_group=8,
                        margin=1.0, stride=1, dilation=1,
                        reduction="mean", use_in_batch=False):
    """JAX/Pallas equivalent of LocalizedIBCELoss.forward (labels is ignored)."""
    del labels, margin, use_in_batch          # unused, matching the PyTorch forward
    assert reduction == "mean", "reference module only exercises reduction='mean'"

    n = examples_per_group
    sample_indices = tuple(range(0, n - dilation, stride))
    assert len(sample_indices) > 0, "need examples_per_group > dilation"
    # TODO(synk): lane-packed layout requires n | 128; other n would need a (G, n)
    # sublane-layout fallback path.
    assert 128 % n == 0, "examples_per_group must divide 128 for the lane-dense kernel"

    flat = jnp.ravel(jnp.asarray(logits))     # keep input dtype (bf16 stays bf16)
    n_total = flat.shape[0]
    assert n_total % n == 0

    r = -(-n_total // 128)                    # rows of 128 lanes
    r_tile = r if r <= _R_TILE_MAX else _R_TILE_MAX
    num_tiles = -(-r // r_tile)
    padded_r = num_tiles * r_tile
    padded_total = padded_r * 128
    needs_mask = padded_total != n_total
    if needs_mask:
        flat = jnp.pad(flat, (0, padded_total - n_total))
    x2 = flat.reshape(padded_r, 128)          # lane-dense view; metadata-only reshape

    kernel = functools.partial(
        _ibce_lane_kernel,
        n=n, dilation=dilation, stride=stride,
        n_total=n_total, r_tile=r_tile, needs_mask=needs_mask,
        inv_p=1.0 / len(sample_indices),
    )

    itemsize = jnp.dtype(x2.dtype).itemsize
    out = pl.pallas_call(
        kernel,
        out_shape=jax.ShapeDtypeStruct((1, 1), jnp.float32),
        grid_spec=pltpu.PrefetchScalarGridSpec(
            num_scalar_prefetch=0,
            grid=(num_tiles,),
            in_specs=[pl.BlockSpec((r_tile, 128), lambda i: (i, 0))],
            out_specs=pl.BlockSpec((1, 1), lambda i: (0, 0),
                                   memory_space=pltpu.MemorySpace.SMEM),
            scratch_shapes=[pltpu.VMEM((1, 128), jnp.float32),
                            pltpu.VMEM((1, 128), jnp.float32),
                            pltpu.VMEM((1, 128), jnp.float32)],
        ),
        compiler_params=pltpu.CompilerParams(
            dimension_semantics=("arbitrary",),
            vmem_limit_bytes=32 * 1024 * 1024,
        ),
        cost_estimate=pl.CostEstimate(
            flops=6 * n_total,
            transcendentals=2 * n_total,      # sigmoid + exp per element
            bytes_accessed=n_total * itemsize,
        ),
    )(x2)
    return out[0, 0]


def _reference_loss(logits, *, n, stride, dilation):
    """Pure-JAX reference mirroring the PyTorch math, for correctness checks."""
    s = jax.nn.sigmoid(jnp.asarray(logits, jnp.float32)).reshape(-1, n)
    idxs = list(range(0, n - dilation, stride))
    loss = 0.0
    for idx in idxs:
        pos = s[:, idx]
        neg = s[:, idx + dilation]
        loss = loss + (-jnp.sum(neg * jax.nn.log_softmax(pos)))
    return loss / len(idxs)


if __name__ == "__main__":
    n = 8
    key = jax.random.PRNGKey(0)
    k1, k2, k3, k4 = jax.random.split(key, 4)

    # Test 1: small deterministic example, 16 groups x 8 = 128 logits (f32).
    g1 = 16
    logits1 = jax.random.normal(k1, (g1 * n,), dtype=jnp.float32)
    labels1 = jax.random.bernoulli(k2, 0.5, (g1 * n,)).astype(jnp.float32)  # unused
    loss1 = jax.block_until_ready(
        localized_ibce_loss(logits1, labels1, examples_per_group=n,
                            stride=1, dilation=1))
    ref1 = _reference_loss(logits1, n=n, stride=1, dilation=1)
    assert jnp.allclose(loss1, ref1, rtol=1e-4, atol=1e-4), (loss1, ref1)

    # Test 2: group count not a multiple of 16 -> exercises the padding mask.
    g2 = 37
    logits2 = jax.random.normal(k3, (g2 * n,), dtype=jnp.float32)
    loss2 = jax.block_until_ready(
        localized_ibce_loss(logits2, None, examples_per_group=n,
                            stride=1, dilation=1))
    ref2 = _reference_loss(logits2, n=n, stride=1, dilation=1)
    assert jnp.allclose(loss2, ref2, rtol=1e-4, atol=1e-4), (loss2, ref2)

    # Test 3: bf16 input passthrough + stride=2, dilation=2.
    g3 = 64
    logits3 = jax.random.normal(k4, (g3 * n,), dtype=jnp.float32).astype(jnp.bfloat16)
    loss3 = jax.block_until_ready(
        localized_ibce_loss(logits3, None, examples_per_group=n,
                            stride=2, dilation=2))
    ref3 = _reference_loss(logits3, n=n, stride=2, dilation=2)
    assert jnp.allclose(loss3, ref3, rtol=1e-4, atol=1e-4), (loss3, ref3)

    print("KERNEL_OK")
</pallas_src>

<mosaic_0001>
module attributes {stable_mosaic.version = 11 : i64} {
  func.func @_ibce_lane_kernel(%arg0: i32, %arg1: memref<1x128xf32, #tpu.memory_space<vmem>>, %arg2: memref<1x1xf32, #tpu.memory_space<smem>>, %arg3: memref<1x128xf32, #tpu.memory_space<vmem>>, %arg4: memref<1x128xf32, #tpu.memory_space<vmem>>, %arg5: memref<1x128xf32, #tpu.memory_space<vmem>>) attributes {dimension_semantics = [#tpu.dimension_semantics<arbitrary>], iteration_bounds = array<i64: 1>, scalar_prefetch = 0 : i64, scratch_operands = 3 : i64, tpu.core_type = #tpu.core_type<tc>, window_params = [{transform_indices = @transform_0, window_bounds = array<i64: 1, 128>}, {transform_indices = @transform_1, window_bounds = array<i64: 1, 1>}]} {
    %c0_i32 = arith.constant 0 : i32
    %0 = arith.cmpi eq, %arg0, %c0_i32 : i32
    %1 = arith.extui %0 : i1 to i32
    %c0_i32_0 = arith.constant 0 : i32
    %2 = arith.cmpi ne, %1, %c0_i32_0 : i32
    scf.if %2 {
      %cst_27 = arith.constant 0.000000e+00 : f32
      %57 = vector.broadcast %cst_27 : f32 to vector<1x128xf32>
      %c0_28 = arith.constant 0 : index
      %c0_29 = arith.constant 0 : index
      %58 = vector.load %arg3[%c0_28, %c0_29] : memref<1x128xf32, #tpu.memory_space<vmem>>, vector<1x128xf32>
      tpu.vector_store %arg3[%c0_28, %c0_29], %57 {strides = array<i32>} : memref<1x128xf32, #tpu.memory_space<vmem>>, vector<1x128xf32>,
      %cst_30 = arith.constant 0.000000e+00 : f32
      %59 = vector.broadcast %cst_30 : f32 to vector<1x128xf32>
      %c0_31 = arith.constant 0 : index
      %c0_32 = arith.constant 0 : index
      %60 = vector.load %arg4[%c0_31, %c0_32] : memref<1x128xf32, #tpu.memory_space<vmem>>, vector<1x128xf32>
      tpu.vector_store %arg4[%c0_31, %c0_32], %59 {strides = array<i32>} : memref<1x128xf32, #tpu.memory_space<vmem>>, vector<1x128xf32>,
      %cst_33 = arith.constant 0.000000e+00 : f32
      %61 = vector.broadcast %cst_33 : f32 to vector<1x128xf32>
      %c0_34 = arith.constant 0 : index
      %c0_35 = arith.constant 0 : index
      %62 = vector.load %arg5[%c0_34, %c0_35] : memref<1x128xf32, #tpu.memory_space<vmem>>, vector<1x128xf32>
      tpu.vector_store %arg5[%c0_34, %c0_35], %61 {strides = array<i32>} : memref<1x128xf32, #tpu.memory_space<vmem>>, vector<1x128xf32>,
    } else {
    }
    %c0 = arith.constant 0 : index
    %c0_1 = arith.constant 0 : index
    %3 = vector.load %arg1[%c0, %c0_1] : memref<1x128xf32, #tpu.memory_space<vmem>>, vector<1x128xf32>
    %4 = arith.negf %3 : vector<1x128xf32>
    %5 = math.exp %4 : vector<1x128xf32>
    %cst = arith.constant 1.000000e+00 : f32
    %6 = vector.broadcast %cst : f32 to vector<1x128xf32>
    %7 = arith.addf %6, %5 : vector<1x128xf32>
    %8 = arith.divf %6, %7 : vector<1x128xf32>
    %9 = vector.extract_strided_slice %8 {offsets = [0, 1], sizes = [1, 127], strides = [1, 1]} : vector<1x128xf32> to vector<1x127xf32>
    %10 = vector.extract_strided_slice %8 {offsets = [0, 0], sizes = [1, 1], strides = [1, 1]} : vector<1x128xf32> to vector<1x1xf32>
    %11 = tpu.concatenate %9, %10 in 1 : vector<1x127xf32>, vector<1x1xf32> -> vector<1x128xf32>
    %12 = tpu.iota {dimensions = array<i32: 1>} : vector<1x128xi32>
    %c8_i32 = arith.constant 8 : i32
    %c0_i32_2 = arith.constant 0 : i32
    %13 = arith.cmpi eq, %c8_i32, %c0_i32_2 : i32
    %c1_i32 = arith.constant 1 : i32
    %14 = arith.select %13, %c1_i32, %c8_i32 : i32
    %15 = vector.broadcast %14 : i32 to vector<1x128xi32>
    %16 = arith.remsi %12, %15 : vector<1x128xi32>
    %c0_i32_3 = arith.constant 0 : i32
    %17 = vector.broadcast %c0_i32_3 : i32 to vector<1x128xi32>
    %18 = arith.cmpi ne, %16, %17 : vector<1x128xi32>
    %c0_i32_4 = arith.constant 0 : i32
    %19 = vector.broadcast %c0_i32_4 : i32 to vector<1x128xi32>
    %20 = arith.cmpi slt, %16, %19 : vector<1x128xi32>
    %c0_i32_5 = arith.constant 0 : i32
    %21 = arith.cmpi slt, %14, %c0_i32_5 : i32
    %22 = vector.broadcast %21 : i1 to vector<1x128xi1>
    %23 = vector.broadcast %22 : vector<1x128xi1> to vector<1x128xi1>
    %24 = arith.xori %20, %23 : vector<1x128xi1>
    %25 = arith.andi %24, %18 : vector<1x128xi1>
    %26 = vector.broadcast %14 : i32 to vector<1x128xi32>
    %27 = arith.addi %16, %26 : vector<1x128xi32>
    %28 = arith.select %25, %27, %16 : vector<1x128xi1>, vector<1x128xi32>
    %c7_i32 = arith.constant 7 : i32
    %29 = vector.broadcast %c7_i32 : i32 to vector<1x128xi32>
    %30 = arith.cmpi slt, %28, %29 : vector<1x128xi32>
    %31 = math.exp %8 : vector<1x128xf32>
    %cst_6 = arith.constant 0.000000e+00 : f32
    %32 = vector.broadcast %cst_6 : f32 to vector<1x128xf32>
    %33 = arith.select %30, %31, %32 : vector<1x128xi1>, vector<1x128xf32>
    %cst_7 = arith.constant 0.000000e+00 : f32
    %34 = vector.broadcast %cst_7 : f32 to vector<1x128xf32>
    %35 = arith.select %30, %11, %34 : vector<1x128xi1>, vector<1x128xf32>
    %36 = arith.mulf %11, %8 : vector<1x128xf32>
    %cst_8 = arith.constant 0.000000e+00 : f32
    %37 = vector.broadcast %cst_8 : f32 to vector<1x128xf32>
    %38 = arith.select %30, %36, %37 : vector<1x128xi1>, vector<1x128xf32>
    %c0_9 = arith.constant 0 : index
    %c0_10 = arith.constant 0 : index
    %39 = vector.load %arg3[%c0_9, %c0_10] : memref<1x128xf32, #tpu.memory_space<vmem>>, vector<1x128xf32>
    %cst_11 = arith.constant dense<0.000000e+00> : vector<128xf32>
    %40 = vector.multi_reduction <add>, %33, %cst_11 [0] : vector<1x128xf32> to vector<128xf32>
    %41 = vector.shape_cast %40 : vector<128xf32> to vector<1x128xf32>
    %42 = arith.addf %39, %41 : vector<1x128xf32>
    %c0_12 = arith.constant 0 : index
    %c0_13 = arith.constant 0 : index
    %43 = vector.load %arg3[%c0_12, %c0_13] : memref<1x128xf32, #tpu.memory_space<vmem>>, vector<1x128xf32>
    tpu.vector_store %arg3[%c0_12, %c0_13], %42 {strides = array<i32>} : memref<1x128xf32, #tpu.memory_space<vmem>>, vector<1x128xf32>,
    %c0_14 = arith.constant 0 : index
    %c0_15 = arith.constant 0 : index
    %44 = vector.load %arg4[%c0_14, %c0_15] : memref<1x128xf32, #tpu.memory_space<vmem>>, vector<1x128xf32>
    %cst_16 = arith.constant dense<0.000000e+00> : vector<128xf32>
    %45 = vector.multi_reduction <add>, %35, %cst_16 [0] : vector<1x128xf32> to vector<128xf32>
    %46 = vector.shape_cast %45 : vector<128xf32> to vector<1x128xf32>
    %47 = arith.addf %44, %46 : vector<1x128xf32>
    %c0_17 = arith.constant 0 : index
    %c0_18 = arith.constant 0 : index
    %48 = vector.load %arg4[%c0_17, %c0_18] : memref<1x128xf32, #tpu.memory_space<vmem>>, vector<1x128xf32>
    tpu.vector_store %arg4[%c0_17, %c0_18], %47 {strides = array<i32>} : memref<1x128xf32, #tpu.memory_space<vmem>>, vector<1x128xf32>,
    %c0_19 = arith.constant 0 : index
    %c0_20 = arith.constant 0 : index
    %49 = vector.load %arg5[%c0_19, %c0_20] : memref<1x128xf32, #tpu.memory_space<vmem>>, vector<1x128xf32>
    %cst_21 = arith.constant dense<0.000000e+00> : vector<128xf32>
    %50 = vector.multi_reduction <add>, %38, %cst_21 [0] : vector<1x128xf32> to vector<128xf32>
    %51 = vector.shape_cast %50 : vector<128xf32> to vector<1x128xf32>
    %52 = arith.addf %49, %51 : vector<1x128xf32>
    %c0_22 = arith.constant 0 : index
    %c0_23 = arith.constant 0 : index
    %53 = vector.load %arg5[%c0_22, %c0_23] : memref<1x128xf32, #tpu.memory_space<vmem>>, vector<1x128xf32>
    tpu.vector_store %arg5[%c0_22, %c0_23], %52 {strides = array<i32>} : memref<1x128xf32, #tpu.memory_space<vmem>>, vector<1x128xf32>,
    %c0_i32_24 = arith.constant 0 : i32
    %54 = arith.cmpi eq, %arg0, %c0_i32_24 : i32
    %55 = arith.extui %54 : i1 to i32
    %cst_25 = arith.constant 0.000000e+00 : f32
    %c0_i32_26 = arith.constant 0 : i32
    %56 = arith.cmpi ne, %55, %c0_i32_26 : i32
    scf.if %56 {
      %c0_27 = arith.constant 0 : index
      %c0_28 = arith.constant 0 : index
      %57 = vector.load %arg3[%c0_27, %c0_28] : memref<1x128xf32, #tpu.memory_space<vmem>>, vector<1x128xf32>
      %c0_29 = arith.constant 0 : index
      %c0_30 = arith.constant 0 : index
      %58 = vector.load %arg4[%c0_29, %c0_30] : memref<1x128xf32, #tpu.memory_space<vmem>>, vector<1x128xf32>
      %59 = vector.extract_strided_slice %57 {offsets = [0, 64], sizes = [1, 64], strides = [1, 1]} : vector<1x128xf32> to vector<1x64xf32>
      %60 = vector.extract_strided_slice %57 {offsets = [0, 0], sizes = [1, 64], strides = [1, 1]} : vector<1x128xf32> to vector<1x64xf32>
      %61 = tpu.concatenate %59, %60 in 1 : vector<1x64xf32>, vector<1x64xf32> -> vector<1x128xf32>
      %62 = arith.addf %57, %61 : vector<1x128xf32>
      %63 = vector.extract_strided_slice %58 {offsets = [0, 64], sizes = [1, 64], strides = [1, 1]} : vector<1x128xf32> to vector<1x64xf32>
      %64 = vector.extract_strided_slice %58 {offsets = [0, 0], sizes = [1, 64], strides = [1, 1]} : vector<1x128xf32> to vector<1x64xf32>
      %65 = tpu.concatenate %63, %64 in 1 : vector<1x64xf32>, vector<1x64xf32> -> vector<1x128xf32>
      %66 = arith.addf %58, %65 : vector<1x128xf32>
      %67 = vector.extract_strided_slice %62 {offsets = [0, 32], sizes = [1, 96], strides = [1, 1]} : vector<1x128xf32> to vector<1x96xf32>
      %68 = vector.extract_strided_slice %62 {offsets = [0, 0], sizes = [1, 32], strides = [1, 1]} : vector<1x128xf32> to vector<1x32xf32>
      %69 = tpu.concatenate %67, %68 in 1 : vector<1x96xf32>, vector<1x32xf32> -> vector<1x128xf32>
      %70 = arith.addf %62, %69 : vector<1x128xf32>
      %71 = vector.extract_strided_slice %66 {offsets = [0, 32], sizes = [1, 96], strides = [1, 1]} : vector<1x128xf32> to vector<1x96xf32>
      %72 = vector.extract_strided_slice %66 {offsets = [0, 0], sizes = [1, 32], strides = [1, 1]} : vector<1x128xf32> to vector<1x32xf32>
      %73 = tpu.concatenate %71, %72 in 1 : vector<1x96xf32>, vector<1x32xf32> -> vector<1x128xf32>
      %74 = arith.addf %66, %73 : vector<1x128xf32>
      %75 = vector.extract_strided_slice %70 {offsets = [0, 16], sizes = [1, 112], strides = [1, 1]} : vector<1x128xf32> to vector<1x112xf32>
      %76 = vector.extract_strided_slice %70 {offsets = [0, 0], sizes = [1, 16], strides = [1, 1]} : vector<1x128xf32> to vector<1x16xf32>
      %77 = tpu.concatenate %75, %76 in 1 : vector<1x112xf32>, vector<1x16xf32> -> vector<1x128xf32>
      %78 = arith.addf %70, %77 : vector<1x128xf32>
      %79 = vector.extract_strided_slice %74 {offsets = [0, 16], sizes = [1, 112], strides = [1, 1]} : vector<1x128xf32> to vector<1x112xf32>
      %80 = vector.extract_strided_slice %74 {offsets = [0, 0], sizes = [1, 16], strides = [1, 1]} : vector<1x128xf32> to vector<1x16xf32>
      %81 = tpu.concatenate %79, %80 in 1 : vector<1x112xf32>, vector<1x16xf32> -> vector<1x128xf32>
      %82 = arith.addf %74, %81 : vector<1x128xf32>
      %83 = vector.extract_strided_slice %78 {offsets = [0, 8], sizes = [1, 120], strides = [1, 1]} : vector<1x128xf32> to vector<1x120xf32>
      %84 = vector.extract_strided_slice %78 {offsets = [0, 0], sizes = [1, 8], strides = [1, 1]} : vector<1x128xf32> to vector<1x8xf32>
      %85 = tpu.concatenate %83, %84 in 1 : vector<1x120xf32>, vector<1x8xf32> -> vector<1x128xf32>
      %86 = arith.addf %78, %85 : vector<1x128xf32>
      %87 = vector.extract_strided_slice %82 {offsets = [0, 8], sizes = [1, 120], strides = [1, 1]} : vector<1x128xf32> to vector<1x120xf32>
      %88 = vector.extract_strided_slice %82 {offsets = [0, 0], sizes = [1, 8], strides = [1, 1]} : vector<1x128xf32> to vector<1x8xf32>
      %89 = tpu.concatenate %87, %88 in 1 : vector<1x120xf32>, vector<1x8xf32> -> vector<1x128xf32>
      %90 = arith.addf %82, %89 : vector<1x128xf32>
      %91 = tpu.iota {dimensions = array<i32: 1>} : vector<1x128xi32>
      %c7_i32_31 = arith.constant 7 : i32
      %92 = vector.broadcast %c7_i32_31 : i32 to vector<1x128xi32>
      %93 = arith.cmpi slt, %91, %92 : vector<1x128xi32>
      %cst_32 = arith.constant 1.000000e+00 : f32
      %94 = vector.broadcast %cst_32 : f32 to vector<1x128xf32>
      %95 = arith.select %93, %86, %94 : vector<1x128xi1>, vector<1x128xf32>
      %96 = math.log %95 : vector<1x128xf32>
      %97 = arith.mulf %96, %90 : vector<1x128xf32>
      %98 = vector.broadcast %cst_25 : f32 to vector<1x128xf32>
      %99 = arith.select %93, %97, %98 : vector<1x128xi1>, vector<1x128xf32>
      %100 = vector.shape_cast %99 : vector<1x128xf32> to vector<1x1x128xf32>
      %cst_33 = arith.constant dense<0.000000e+00> : vector<1xf32>
      %101 = vector.multi_reduction <add>, %100, %cst_33 [1, 2] : vector<1x1x128xf32> to vector<1xf32>
      %102 = vector.shape_cast %101 : vector<1xf32> to vector<1x1x1xf32>
      %103 = vector.extract %102[0, 0, 0] : f32 from vector<1x1x1xf32>
      %c0_34 = arith.constant 0 : index
      %c0_35 = arith.constant 0 : index
      %104 = vector.load %arg5[%c0_34, %c0_35] : memref<1x128xf32, #tpu.memory_space<vmem>>, vector<1x128xf32>
      %105 = vector.shape_cast %104 : vector<1x128xf32> to vector<1x1x128xf32>
      %cst_36 = arith.constant dense<0.000000e+00> : vector<1xf32>
      %106 = vector.multi_reduction <add>, %105, %cst_36 [1, 2] : vector<1x1x128xf32> to vector<1xf32>
      %107 = vector.shape_cast %106 : vector<1xf32> to vector<1x1x1xf32>
      %108 = vector.extract %107[0, 0, 0] : f32 from vector<1x1x1xf32>
      %109 = arith.subf %103, %108 : f32
      %cst_37 = arith.constant 0.142857149 : f32
      %110 = arith.mulf %109, %cst_37 : f32
      %c0_38 = arith.constant 0 : index
      %c0_39 = arith.constant 0 : index
      %111 = memref.load %arg2[%c0_38, %c0_39] : memref<1x1xf32, #tpu.memory_space<smem>>
      memref.store %110, %arg2[%c0_38, %c0_39] : memref<1x1xf32, #tpu.memory_space<smem>>
    } else {
    }
    return
  }
  func.func @transform_0(%arg0: i32) -> (i32, i32) {
    %c0_i32 = arith.constant 0 : i32
    %c0_i32_0 = arith.constant 0 : i32
    return %arg0, %c0_i32 : i32, i32
  }
  func.func @transform_1(%arg0: i32) -> (i32, i32) {
    %c0_i32 = arith.constant 0 : i32
    %c0_i32_0 = arith.constant 0 : i32
    %c0_i32_1 = arith.constant 0 : i32
    return %c0_i32, %c0_i32_0 : i32, i32
  }
}

</mosaic_0001>

<llo_original>
// kernel: tpu_custom_call.1
$region0: #{tpu_custom_call.1}
  #allocation0 [shape = 'u32[]', space=smem, size = 0x4, offset = 0x4, fixed_abs, tag = 'smem constant byte address 0x4 - core index']
  #allocation1 [shape = 'u32[144,128]{1,0:T(1,128)}', space=vmem, size = 0x12000, scoped, tag = 'internal scratch']
  #allocation2 [shape = 'f32[1,128]{1,0:T(1,128)}', space=vmem, size = 0x200, scoped, tag = 'scratch operand']
  #allocation3 [shape = 'f32[1,128]{1,0:T(1,128)}', space=vmem, size = 0x200, scoped, tag = 'scratch operand']
  #allocation4 [shape = 'f32[1,128]{1,0:T(1,128)}', space=vmem, size = 0x200, scoped, tag = 'scratch operand']
  %s0 = inlined_call_operand.hbm [shape: f32[1,128], index: 0, kind: input, shape index: {}]
  %s1 = inlined_call_operand.hbm [shape: f32[1,1], index: 1, kind: output, shape index: {}]
  %s2 = sld [smem:[#allocation0]]
  $region26: #{tpu_custom_call.1} parent=0
    _
  %s4 = ssub.s32 1, %s2
  %s5 = scalar_select 0, %s4, %s2
  $region1: #{tpu_custom_call.1} parent=0
    #allocation5 [shape = 'u8[512]{0}', space=vmem, size = 0x400, scoped, tag = 'input window, operand 0, single buffered']
    #allocation6 [shape = 's32[1]{0}', space=sflag, size = 0x4, scoped, tag = 'scoped memory for tpu_custom_call.1']
    #allocation7 [shape = 's32[1]{0}', space=sflag, size = 0x4, scoped, tag = 'scoped memory for tpu_custom_call.1']
    #allocation8 [shape = 'u8[512]{0}', space=smem, size = 0x200, scoped, tag = 'output window, operand 0, single buffered']
    %6 = vsyncpa [#allocation6], 0
    %7 = vsyncpa [#allocation7], 0
    // Predicated region
    $region2: #{tpu_custom_call.1} parent=1 // pred_check
      _
    $region3: #{tpu_custom_call.1} parent=1 // pred_check_branch
      %9 = sbr.rel (0) target = $region5
    $region4: #{tpu_custom_call.1} parent=1 // pred_region
      %s11 = ssub.s32 16, 16
      %12 = vsyncadd [#allocation6], %s11
      %s14 = sshll.u32 [#allocation5], 4
      %s15 = int_to_ptr.vmem [resolvable:$true] %s14
      %17 = dma.hbm_to_vmem [thread:$0]  %s0, 16, %s15, [#allocation6]
    $region5: #{tpu_custom_call.1} parent=1 // pred_fallthru
      _
    // Predicated region
    $region6: #{tpu_custom_call.1} parent=1 // pred_check
      _
    $region7: #{tpu_custom_call.1} parent=1 // pred_check_branch
      %19 = sbr.rel (0) target = $region9
    $region8: #{tpu_custom_call.1} parent=1 // pred_region
      %20 = dma.done [#allocation6], 16
    $region9: #{tpu_custom_call.1} parent=1 // pred_fallthru
      _
    %p21 = scmp.eq.s32.totalorder 0, 0
    // Predicated region
    $region10: #{tpu_custom_call.1} parent=1 // pred_check
      %p22 = pneg %p21
    $region11: #{tpu_custom_call.1} parent=1 // pred_check_branch
      %24 = sbr.rel (%p22) target = $region13
    $region12: #{tpu_custom_call.1} parent=1 // pred_region
      %25 = vst [vmem:[#allocation2] sm:$0x1] 0.0
      %26 = vst [vmem:[#allocation3] sm:$0x1] 0.0
      %27 = vst [vmem:[#allocation4] sm:$0x1] 0.0
    $region13: #{tpu_custom_call.1} parent=1 // pred_fallthru
      _
    %v28 = vld [vmem:[#allocation5] sm:$0x1]
    %v29 = vxor.u32 %v28, 2147483648
    %v30 = vmul.f32 %v29, 1.442695
    %v31 = vpow.pop %v30
    %v32 = vadd.f32 %v31, 1.0
    %v33 = vrcp.pop %v32
    %v34 = vmul.f32 1.0, %v33
    %v36 = vlaneseq
    %v37 = vshrl.u32 %v36, 7
    %v38 = vsub.s32 0, %v37
    %v39 = vrot.slane %v34, %v38
    %40 = vrot.lane.b32.xlu0 %v39, 127
    %v41 = vpop.permute.xlu0 %40
    %v43 = vlaneseq
    %v44 = vand.u32 %v43, 127
    %vm45 = vcmp.lt.s32.totalorder %v44, 0
    %v46 = vsub.s32 0, %v44
    %v47 = vsel %vm45, %v46, %v44
    %v48 = vshrl.u32 %v47, 3
    %v49 = vand.u32 %v47, 7
    %v50 = vsub.s32 0, %v49
    %v51 = vsel %vm45, %v50, %v49
    %vm52 = vcmp.ne.s32.totalorder %v51, 0
    %vm53 = vcmp.lt.s32.totalorder %v51, 0
    %vm54 = vmand %vm53, %vm52
    %v55 = vadd.s32 %v51, 8
    %v56 = vsel %vm54, %v55, %v51
    %vm57 = vcmp.lt.s32.totalorder %v56, 7
    %v58 = vmul.f32 %v34, 1.442695
    %v59 = vpow.pop %v58
    %v60 = vsel %vm57, %v59, 0.0
    %v61 = vsel %vm57, %v41, 0.0
    %v62 = vmul.f32 %v41, %v34
    %v63 = vsel %vm57, %v62, 0.0
    %v64 = vld [vmem:[#allocation2] sm:$0x1]
    %v65 = vadd.f32 %v60, 0.0
    %v66 = vadd.f32 %v64, %v65
    %67 = vst [vmem:[#allocation2] sm:$0x1] %v66
    %v68 = vld [vmem:[#allocation3] sm:$0x1]
    %v69 = vadd.f32 %v61, 0.0
    %v70 = vadd.f32 %v68, %v69
    %71 = vst [vmem:[#allocation3] sm:$0x1] %v70
    %v72 = vld [vmem:[#allocation4] sm:$0x1]
    %v73 = vadd.f32 %v63, 0.0
    %v74 = vadd.f32 %v72, %v73
    %75 = vst [vmem:[#allocation4] sm:$0x1] %v74
    // Predicated region
    $region14: #{tpu_custom_call.1} parent=1 // pred_check
      %p76 = pneg %p21
    $region15: #{tpu_custom_call.1} parent=1 // pred_check_branch
      %78 = sbr.rel (%p76) target = $region17
    $region16: #{tpu_custom_call.1} parent=1 // pred_region
      %v79 = vld [vmem:[#allocation2] sm:$0x1]
      %v80 = vld [vmem:[#allocation3] sm:$0x1]
      %v82 = vlaneseq
      %v83 = vshrl.u32 %v82, 7
      %v84 = vsub.s32 0, %v83
      %v85 = vrot.slane %v79, %v84
      %86 = vrot.lane.b32.xlu0 %v85, 64
      %v87 = vpop.permute.xlu0 %86
      %v89 = vadd.f32 %v79, %v87
      %v91 = vlaneseq
      %v92 = vshrl.u32 %v91, 7
      %v93 = vsub.s32 0, %v92
      %v94 = vrot.slane %v80, %v93
      %95 = vrot.lane.b32.xlu0 %v94, 64
      %v96 = vpop.permute.xlu0 %95
      %v98 = vadd.f32 %v80, %v96
      %v100 = vlaneseq
      %v101 = vshrl.u32 %v100, 7
      %v102 = vsub.s32 0, %v101
      %v103 = vrot.slane %v89, %v102
      %104 = vrot.lane.b32.xlu0 %v103, 96
      %v105 = vpop.permute.xlu0 %104
      %v107 = vadd.f32 %v89, %v105
      %v109 = vlaneseq
      %v110 = vshrl.u32 %v109, 7
      %v111 = vsub.s32 0, %v110
      %v112 = vrot.slane %v98, %v111
      %113 = vrot.lane.b32.xlu0 %v112, 96
      %v114 = vpop.permute.xlu0 %113
      %v116 = vadd.f32 %v98, %v114
      %v118 = vlaneseq
      %v119 = vshrl.u32 %v118, 7
      %v120 = vsub.s32 0, %v119
      %v121 = vrot.slane %v107, %v120
      %122 = vrot.lane.b32.xlu0 %v121, 112
      %v123 = vpop.permute.xlu0 %122
      %v125 = vadd.f32 %v107, %v123
      %v127 = vlaneseq
      %v128 = vshrl.u32 %v127, 7
      %v129 = vsub.s32 0, %v128
      %v130 = vrot.slane %v116, %v129
      %131 = vrot.lane.b32.xlu0 %v130, 112
      %v132 = vpop.permute.xlu0 %131
      %v134 = vadd.f32 %v116, %v132
      %v136 = vlaneseq
      %v137 = vshrl.u32 %v136, 7
      %v138 = vsub.s32 0, %v137
      %v139 = vrot.slane %v125, %v138
      %140 = vrot.lane.b32.xlu0 %v139, 120
      %v141 = vpop.permute.xlu0 %140
      %v143 = vadd.f32 %v125, %v141
      %v145 = vlaneseq
      %v146 = vshrl.u32 %v145, 7
      %v147 = vsub.s32 0, %v146
      %v148 = vrot.slane %v134, %v147
      %149 = vrot.lane.b32.xlu0 %v148, 120
      %v150 = vpop.permute.xlu0 %149
      %v152 = vadd.f32 %v134, %v150
      %vm153 = vcmp.lt.s32.totalorder %v44, 7
      %v154 = vsel %vm153, %v143, 1.0
      %v155 = vlog2.pop %v154
      %v156 = vmul.f32 %v155, 0.6931472
      %v157 = vmul.f32 %v156, %v152
      %v158 = vsel %vm153, %v157, 0.0
      %vm159 = vcmask 1040384
      %v160 = vsel %vm159, %v158, 0.0
      %161 = vadd.xlane.f32.xlu0 %v160
      %v162 = vpop.xlane.xlu0 %161
      %v163 = vrot.slane %v162, 4
      %v164 = vadd.f32 %v162, %v163
      %v165 = vrot.slane %v164, 2
      %v166 = vadd.f32 %v164, %v165
      %v167 = vrot.slane %v166, 1
      %v168 = vadd.f32 %v166, %v167
      %s169 = vtos %v168
      %v170 = vld [vmem:[#allocation4] sm:$0x1]
      %v171 = vsel %vm159, %v170, 0.0
      %172 = vadd.xlane.f32.xlu0 %v171
      %v173 = vpop.xlane.xlu0 %172
      %v174 = vrot.slane %v173, 4
      %v175 = vadd.f32 %v173, %v174
      %v176 = vrot.slane %v175, 2
      %v177 = vadd.f32 %v175, %v176
      %v178 = vrot.slane %v177, 1
      %v179 = vadd.f32 %v177, %v178
      %s180 = vtos %v179
      %s181 = ssub.f32 %s169, %s180
      %s182 = smul.f32 %s181, 0.14285715
      %s183 = scalar_lea.smem [#allocation8], 0
      %184 = sst [smem:[%s183]] %s182
    $region17: #{tpu_custom_call.1} parent=1 // pred_fallthru
      _
    // Predicated region
    $region18: #{tpu_custom_call.1} parent=1 // pred_check
      _
    $region19: #{tpu_custom_call.1} parent=1 // pred_check_branch
      %186 = sbr.rel (0) target = $region21
    $region20: #{tpu_custom_call.1} parent=1 // pred_region
      %s188 = ssub.s32 16, 16
      %189 = vsyncadd [#allocation7], %s188
      %192 = dma.smem_to_hbm [#allocation8], 16, %s1, [#allocation7]
    $region21: #{tpu_custom_call.1} parent=1 // pred_fallthru
      _
    // Predicated region
    $region22: #{tpu_custom_call.1} parent=1 // pred_check
      _
    $region23: #{tpu_custom_call.1} parent=1 // pred_check_branch
      %194 = sbr.rel (0) target = $region25
    $region24: #{tpu_custom_call.1} parent=1 // pred_region
      %195 = dma.done [#allocation7], 16
    $region25: #{tpu_custom_call.1} parent=1 // pred_fallthru
      _
    %196 = sfence
    %197 = vsyncpa [#allocation6], 1
    %198 = vsyncpa [#allocation7], 1

</llo_original>
